<compile_context>
chip_gen: v5e
topology: v5e:2x2
jax: 0.10.0
libtpu: 0.0.40
codegen_flags: <defaults>
</compile_context>

<pallas_src>
import functools

import jax
import jax.numpy as jnp
from jax.experimental import pallas as pl
from jax.experimental.pallas import tpu as pltpu


def _gated_attn_kernel(x_ref, wab_ref, wct_ref, out_ref, *, d_hidden, use_vpu_proj):
    # x_ref:   (1, L, TN)  current batch element, current N tile (channels-first)
    # wab_ref: (2D, L)     fused [Wa; Wb] weights, compute dtype (resident)
    # wct_ref: (D, C)      final projection weights, f32 (resident)
    # out_ref: (1, C, TN)  lane-dense output tile
    x = x_ref[0].astype(wab_ref.dtype)                       # (L, TN) cast in VMEM
    ab = jnp.dot(wab_ref[...], x,
                 preferred_element_type=jnp.float32)          # (2D, TN) f32 accum
    a = jnp.tanh(ab[:d_hidden])                               # (D, TN) f32
    b = jax.nn.sigmoid(ab[d_hidden:])                         # (D, TN) f32
    gated = a * b                                              # (D, TN) f32

    wct = wct_ref[...]                                         # (D, C) f32
    n_cls = wct.shape[1]
    if use_vpu_proj:
        # C < 8: VPU multiply + D-axis (sublane) reduce on the XLU; avoids an
        # MXU pass that would fill only C of 128/256 result rows.
        rows = []
        for c in range(n_cls):                                 # static, tiny
            w_col = wct[:, c:c + 1]                            # (D, 1) -> lane bcast
            rows.append(jnp.sum(w_col * gated, axis=0, keepdims=True))  # (1, TN)
        out = rows[0] if n_cls == 1 else jnp.concatenate(rows, axis=0)  # (C, TN)
    else:
        # Large C: use the MXU.
        out = jnp.einsum("dc,dn->cn",
                         wct.astype(wab_ref.dtype),
                         gated.astype(wab_ref.dtype),
                         preferred_element_type=jnp.float32)   # (C, TN)
    out_ref[0] = out.astype(out_ref.dtype)


def attn_net_gated_conv(x, wa, wb, wc, *, tile_n=None, compute_dtype=jnp.bfloat16):
    """Forward pass of Attn_Net_Gated_Conv.

    Args:
      x:  (B, L, N) — PyTorch NCL layout.  May be f32 or bf16; supplying bf16
          features halves the dominant HBM traffic (the kernel casts to the
          compute dtype in VMEM either way, so there is no extra HBM pass).
      wa: (D, L) weight of attention_a Conv1d (kernel dim squeezed).
      wb: (D, L) weight of attention_b Conv1d.
      wc: (C, D) weight of attention_c Conv1d.
      tile_n: N tile size (multiple of 256).  Default: picked from the
          device's physical VMEM (2048 on 64 MiB parts, 4096 on 128 MiB).
      compute_dtype: MXU input dtype (accumulation is always f32).

    Returns:
      (A, x) with A of shape (B, C, N) in f32, matching the PyTorch module.

    Note: the weight fusion/cast below is tiny and constant-folds under jit;
    hoist it per-model if calling this wrapper repeatedly un-jitted.
    """
    B, L, N = x.shape
    D = wa.shape[0]
    C = wc.shape[0]

    # Fused gate weights: one MXU matmul produces both pre-activations.
    wab = jnp.concatenate([wa, wb], axis=0).astype(compute_dtype)   # (2D, L)
    # Final projection kept in f32, (D, C) layout for the VPU path.
    wct = jnp.asarray(wc, jnp.float32).T                            # (D, C)

    # Generation-aware defaults from physical VMEM (48 MiB cap on v7x's 64 MiB,
    # 96 MiB cap on v5e/v6e's 128 MiB).
    try:
        info = pltpu.get_tpu_info()
        vmem_phys = int(getattr(info, "vmem_capacity_bytes", 0)) or (64 << 20)
    except Exception:  # noqa: BLE001 - fall back to the most conservative part
        vmem_phys = 64 << 20
    if tile_n is None:
        tile_n = 4096 if vmem_phys >= (128 << 20) else 2048

    # N tiling.  Small N: single full-extent tile (always a valid block shape).
    # Larger N: tile with a multiple of 256; the ragged last tile is handled by
    # Pallas (padded reads / dropped OOB writes) — no jnp.pad, no output slice.
    if N <= 256:
        tn = N
    else:
        assert tile_n % 256 == 0, "tile_n must be a multiple of 256"
        tn = min(tile_n, (N // 256) * 256)
    grid = (B, pl.cdiv(N, tn))

    # VMEM budget estimate (conservative), capped at 75% of physical VMEM.
    x_bytes = jnp.dtype(x.dtype).itemsize
    cd_bytes = jnp.dtype(compute_dtype).itemsize
    vmem_est = (2 * L * tn * x_bytes                 # double-buffered x tiles
                + L * tn * cd_bytes                  # in-VMEM bf16 copy of x tile
                + 2 * C * tn * 4                     # double-buffered out tiles
                + 2 * (2 * D * L * cd_bytes + D * C * 4)   # resident weights (x2 safety)
                + 5 * D * tn * 4)                    # f32 intermediates (ab/a/b/gated)
    vmem_limit = min(2 * vmem_est + (8 << 20), (vmem_phys * 3) // 4)

    A = pl.pallas_call(
        functools.partial(_gated_attn_kernel, d_hidden=D, use_vpu_proj=(C < 8)),
        out_shape=jax.ShapeDtypeStruct((B, C, N), jnp.float32),
        grid_spec=pltpu.PrefetchScalarGridSpec(
            num_scalar_prefetch=0,
            grid=grid,
            in_specs=[
                pl.BlockSpec((1, L, tn), lambda b, n: (b, 0, n)),
                pl.BlockSpec((2 * D, L), lambda b, n: (0, 0)),   # resident
                pl.BlockSpec((D, C), lambda b, n: (0, 0)),       # resident
            ],
            out_specs=pl.BlockSpec((1, C, tn), lambda b, n: (b, 0, n)),
        ),
        compiler_params=pltpu.CompilerParams(
            dimension_semantics=("parallel", "parallel"),
            vmem_limit_bytes=int(vmem_limit)),
    )(x, wab, wct)

    return A, x


def _reference(x, wa, wb, wc):
    # Pure-JAX f32 reference of the PyTorch forward (1x1 Conv1d == channel matmul).
    a = jnp.tanh(jnp.einsum("dl,bln->bdn", wa, x))
    b = jax.nn.sigmoid(jnp.einsum("dl,bln->bdn", wb, x))
    A = jnp.einsum("cd,bdn->bcn", wc, a * b)
    return A, x


if __name__ == "__main__":
    # Small, module-consistent shapes: L (input channels), D (hidden), C = n_classes.
    B, L, D, C, N = 2, 32, 16, 1, 8

    key = jax.random.PRNGKey(0)
    kx, ka, kb, kc = jax.random.split(key, 4)

    x = jax.random.normal(kx, (B, L, N), dtype=jnp.float32)
    # Conv1d(L, D, kernel_size=1, bias=False) weight is (D, L, 1) -> squeeze to (D, L).
    wa = jax.random.normal(ka, (D, L), dtype=jnp.float32) * 0.05
    wb = jax.random.normal(kb, (D, L), dtype=jnp.float32) * 0.05
    wc = jax.random.normal(kc, (C, D), dtype=jnp.float32) * 0.05
    # TODO(synk): dropout=False path only (the module's optional Dropout(0.25) is inactive at eval).

    # Path 1: small N (single full-extent tile per batch element, VPU projection).
    A, x_out = attn_net_gated_conv(x, wa, wb, wc)
    jax.block_until_ready(A)
    jax.block_until_ready(x_out)

    A_ref, _ = _reference(x, wa, wb, wc)
    assert A.shape == (B, C, N), A.shape
    assert x_out.shape == x.shape
    # bf16 MXU inputs with f32 accumulation -> loosened tolerance vs f32 reference.
    assert jnp.allclose(A, A_ref, atol=2e-2, rtol=2e-2), "mismatch vs reference"
    assert jnp.allclose(x_out, x), "x passthrough mismatch"

    # Path 2: tiled N with a ragged last tile (exercises grid=(B, cdiv(N, tn)) with
    # no wrapper-side padding: OOB reads padded, OOB writes dropped).
    N2 = 520
    x2 = jax.random.normal(kx, (B, L, N2), dtype=jnp.float32)
    A2, _ = attn_net_gated_conv(x2, wa, wb, wc, tile_n=256)
    jax.block_until_ready(A2)
    A2_ref, _ = _reference(x2, wa, wb, wc)
    assert A2.shape == (B, C, N2), A2.shape
    assert jnp.allclose(A2, A2_ref, atol=2e-2, rtol=2e-2), "tiled-path mismatch"

    # Path 3: bf16 features (halves dominant HBM traffic; no in-kernel change).
    A3, _ = attn_net_gated_conv(x2.astype(jnp.bfloat16), wa, wb, wc, tile_n=256)
    jax.block_until_ready(A3)
    assert jnp.allclose(A3, A2_ref, atol=5e-2, rtol=5e-2), "bf16-input mismatch"

    print("KERNEL_OK")
</pallas_src>

<mosaic_0001>
module attributes {stable_mosaic.version = 11 : i64} {
  func.func @_gated_attn_kernel(%arg0: i32, %arg1: i32, %arg2: memref<1x32x8xf32, #tpu.memory_space<vmem>>, %arg3: memref<32x32xbf16, #tpu.memory_space<vmem>>, %arg4: memref<16x1xf32, #tpu.memory_space<vmem>>, %arg5: memref<1x1x8xf32, #tpu.memory_space<vmem>>) attributes {dimension_semantics = [#tpu.dimension_semantics<parallel>, #tpu.dimension_semantics<parallel>], iteration_bounds = array<i64: 2, 1>, scalar_prefetch = 0 : i64, scratch_operands = 0 : i64, tpu.core_type = #tpu.core_type<tc>, window_params = [{transform_indices = @transform_0, window_bounds = array<i64: 1, 32, 8>}, {pipeline_mode = #tpu.pipeline_mode<synchronous>, transform_indices = @transform_1, window_bounds = array<i64: 32, 32>}, {pipeline_mode = #tpu.pipeline_mode<synchronous>, transform_indices = @transform_2, window_bounds = array<i64: 16, 1>}, {transform_indices = @transform_3, window_bounds = array<i64: 1, 1, 8>}]} {
    %c0 = arith.constant 0 : index
    %c0_0 = arith.constant 0 : index
    %c0_1 = arith.constant 0 : index
    %0 = vector.load %arg2[%c0, %c0_0, %c0_1] : memref<1x32x8xf32, #tpu.memory_space<vmem>>, vector<1x32x8xf32>
    %1 = vector.shape_cast %0 : vector<1x32x8xf32> to vector<32x8xf32>
    %2 = arith.truncf %1 : vector<32x8xf32> to vector<32x8xbf16>
    %c0_2 = arith.constant 0 : index
    %c0_3 = arith.constant 0 : index
    %3 = vector.load %arg3[%c0_2, %c0_3] : memref<32x32xbf16, #tpu.memory_space<vmem>>, vector<32x32xbf16>
    %cst = arith.constant dense<0.000000e+00> : vector<32x8xf32>
    %4 = tpu.matmul %3, %2, %cst {dimension_numbers = #tpu.dot_dimension_numbers<[1], [0], [0], [1], [0, 0, 1, 1], [], []>} : vector<32x32xbf16>, vector<32x8xbf16>, vector<32x8xf32> -> vector<32x8xf32>
    %5 = vector.extract_strided_slice %4 {offsets = [0, 0], sizes = [16, 8], strides = [1, 1]} : vector<32x8xf32> to vector<16x8xf32>
    %6 = math.tanh %5 : vector<16x8xf32>
    %7 = vector.extract_strided_slice %4 {offsets = [16, 0], sizes = [16, 8], strides = [1, 1]} : vector<32x8xf32> to vector<16x8xf32>
    %8 = arith.negf %7 : vector<16x8xf32>
    %9 = math.exp %8 : vector<16x8xf32>
    %cst_4 = arith.constant 1.000000e+00 : f32
    %10 = vector.broadcast %cst_4 : f32 to vector<16x8xf32>
    %11 = arith.addf %10, %9 : vector<16x8xf32>
    %12 = arith.divf %10, %11 : vector<16x8xf32>
    %13 = arith.mulf %6, %12 : vector<16x8xf32>
    %c0_5 = arith.constant 0 : index
    %c0_6 = arith.constant 0 : index
    %14 = vector.load %arg4[%c0_5, %c0_6] : memref<16x1xf32, #tpu.memory_space<vmem>>, vector<16x1xf32>
    %15 = vector.broadcast %14 : vector<16x1xf32> to vector<16x8xf32>
    %16 = arith.mulf %15, %13 : vector<16x8xf32>
    %cst_7 = arith.constant dense<0.000000e+00> : vector<8xf32>
    %17 = vector.multi_reduction <add>, %16, %cst_7 [0] : vector<16x8xf32> to vector<8xf32>
    %18 = vector.shape_cast %17 : vector<8xf32> to vector<1x8xf32>
    %c0_8 = arith.constant 0 : index
    %c0_9 = arith.constant 0 : index
    %c0_10 = arith.constant 0 : index
    %19 = vector.load %arg5[%c0_8, %c0_9, %c0_10] : memref<1x1x8xf32, #tpu.memory_space<vmem>>, vector<1x1x8xf32>
    %20 = vector.shape_cast %19 : vector<1x1x8xf32> to vector<1x8xf32>
    %21 = vector.shape_cast %18 : vector<1x8xf32> to vector<1x1x8xf32>
    tpu.vector_store %arg5[%c0_8, %c0_9, %c0_10], %21 {strides = array<i32>} : memref<1x1x8xf32, #tpu.memory_space<vmem>>, vector<1x1x8xf32>,
    return
  }
  func.func @transform_0(%arg0: i32, %arg1: i32) -> (i32, i32, i32) {
    %c0_i32 = arith.constant 0 : i32
    %c0_i32_0 = arith.constant 0 : i32
    return %arg0, %c0_i32, %arg1 : i32, i32, i32
  }
  func.func @transform_1(%arg0: i32, %arg1: i32) -> (i32, i32) {
    %c0_i32 = arith.constant 0 : i32
    %c0_i32_0 = arith.constant 0 : i32
    %c0_i32_1 = arith.constant 0 : i32
    return %c0_i32, %c0_i32_0 : i32, i32
  }
  func.func @transform_2(%arg0: i32, %arg1: i32) -> (i32, i32) {
    %c0_i32 = arith.constant 0 : i32
    %c0_i32_0 = arith.constant 0 : i32
    %c0_i32_1 = arith.constant 0 : i32
    return %c0_i32, %c0_i32_0 : i32, i32
  }
  func.func @transform_3(%arg0: i32, %arg1: i32) -> (i32, i32, i32) {
    %c0_i32 = arith.constant 0 : i32
    %c0_i32_0 = arith.constant 0 : i32
    return %arg0, %c0_i32, %arg1 : i32, i32, i32
  }
}

</mosaic_0001>

<llo_original>
// kernel: tpu_custom_call.1
$region0: #{tpu_custom_call.1}
  #allocation0 [shape = 'u32[]', space=smem, size = 0x4, offset = 0x4, fixed_abs, tag = 'smem constant byte address 0x4 - core index']
  #allocation1 [shape = 'u32[72,128]{1,0:T(1,128)}', space=vmem, size = 0x9000, scoped, tag = 'internal scratch']
  %s0 = inlined_call_operand.vmem [shape: f32[2,32,8], index: 0, kind: input, shape index: {}]
  %s1 = inlined_call_operand.vmem [shape: bf16[32,32], index: 1, kind: input, shape index: {}]
  %s2 = inlined_call_operand.vmem [shape: f32[16,1], index: 2, kind: input, shape index: {}]
  %s3 = inlined_call_operand.hbm [shape: f32[2,1,8], index: 3, kind: output, shape index: {}]
  %s4 = sld [smem:[#allocation0]]
  $region45: #{tpu_custom_call.1} parent=0
    _
  %s6 = ssub.s32 1, %s4
  %s7 = scalar_select 0, %s6, %s4
  $region1: #{tpu_custom_call.1} parent=0
    #allocation2 [shape = 'u8[1024]{0}', space=vmem, size = 0x400, scoped, tag = 'output window, operand 0']
    #allocation3 [shape = 's32[2]{0}', space=sflag, size = 0x8, scoped, tag = 'scoped memory for tpu_custom_call.1']
    %8 = vsyncpa [#allocation3], 0
    %s9 = scalar_lea.sflag [#allocation3], 1
    %10 = vsyncpa %s9, 0
    loop: start=0, step=1, limit=4
    $region2: #{tpu_custom_call.1} parent=1 // loop_pre_header
      _
    $region3: #{tpu_custom_call.1} parent=1 // loop_header
      %s12 = sphi 0, %s16
      %p13 = scmp.ge.s32.totalorder %s12, 4
      %s19 = sphi 0, %s31
      %s20 = sphi 0, %s27
      %s21 = sphi 0, %s19
      %s22 = sphi 0, %s20
      %s23 = sphi 0, %s21
      %s24 = sphi 0, %s22
      %s36 = sphi 0, %s38
      %s39 = sphi 0, %s36
      %s40 = sphi 0, %s39
      %s56 = sphi 0, %s40
      %s60 = sphi 0, %s60
      %s62 = sphi 0, %s60
      %s63 = sphi 0, %s62
      %s77 = sphi 0, %s63
      %s81 = sphi 0, %s81
      %s83 = sphi 0, %s81
      %s84 = sphi 0, %s83
      %s98 = sphi 0, %s84
      %s106 = sphi 0, %s108
      %s109 = sphi 0, %s106
      %s110 = sphi 0, %s109
      %s126 = sphi 0, %s110
    $region4: #{tpu_custom_call.1} parent=1 // loop_header_branch
      %15 = sbr.rel (%p13) target = $region8
    $region5: #{tpu_custom_call.1} parent=1 // loop_body
      %s17 = ssub.s32 %s12, 1
      %s18 = ssub.s32 %s12, 2
      %s25 = sadd.s32 1, %s20
      %p26 = scmp.ge.s32.totalorder %s25, 1
      %s27 = scalar_select %p26, 0, %s25
      %s28 = sadd.s32 1, %s19
      %s29 = scalar_select %p26, %s28, %s19
      %p30 = scmp.ge.s32.totalorder %s29, 2
      %s31 = scalar_select %p30, 0, %s29
      %s32 = ssub.s32 %s19, %s31
      %s33 = ssub.s32 %s20, %s27
      %s34 = sor.u32 %s32, %s33
      %p35 = scmp.eq.s32.totalorder %s34, 0
      %s37 = sadd.s32 %s36, 1
      %s38 = scalar_select %p35, %s36, %s37
      %p41 = pneg %p35
      %p42 = scmp.eq.s32.totalorder %s12, 1
      %p43 = por %p41, %p42
      %p44 = scmp.ne.s32.totalorder %s36, %s39
      %p45 = scmp.eq.s32.totalorder %s12, 0
      %p46 = por %p44, %p45
      %p47 = scmp.ne.s32.totalorder %s36, %s39
      %p48 = scmp.eq.s32.totalorder %s17, 1
      %p49 = por %p47, %p48
      %p50 = scmp.ne.s32.totalorder %s39, %s40
      %p51 = scmp.eq.s32.totalorder %s17, 0
      %p52 = por %p50, %p51
      %p53 = scmp.ne.s32.totalorder %s39, %s40
      %p54 = scmp.eq.s32.totalorder %s18, 1
      %p55 = por %p53, %p54
      %p57 = scmp.ne.s32.totalorder %s40, %s56
      %p58 = scmp.eq.s32.totalorder %s18, 0
      %p59 = por %p57, %p58
      %s61 = sadd.s32 %s60, 1
      %p64 = scmp.eq.s32.totalorder %s12, 1
      %p65 = scmp.ne.s32.totalorder %s60, %s62
      %p66 = scmp.eq.s32.totalorder %s12, 0
      %p67 = por %p65, %p66
      %p68 = scmp.ne.s32.totalorder %s60, %s62
      %p69 = scmp.eq.s32.totalorder %s17, 1
      %p70 = por %p68, %p69
      %p71 = scmp.ne.s32.totalorder %s62, %s63
      %p72 = scmp.eq.s32.totalorder %s17, 0
      %p73 = por %p71, %p72
      %p74 = scmp.ne.s32.totalorder %s62, %s63
      %p75 = scmp.eq.s32.totalorder %s18, 1
      %p76 = por %p74, %p75
      %p78 = scmp.ne.s32.totalorder %s63, %s77
      %p79 = scmp.eq.s32.totalorder %s18, 0
      %p80 = por %p78, %p79
      %s82 = sadd.s32 %s81, 1
      %p85 = scmp.eq.s32.totalorder %s12, 1
      %p86 = scmp.ne.s32.totalorder %s81, %s83
      %p87 = scmp.eq.s32.totalorder %s12, 0
      %p88 = por %p86, %p87
      %p89 = scmp.ne.s32.totalorder %s81, %s83
      %p90 = scmp.eq.s32.totalorder %s17, 1
      %p91 = por %p89, %p90
      %p92 = scmp.ne.s32.totalorder %s83, %s84
      %p93 = scmp.eq.s32.totalorder %s17, 0
      %p94 = por %p92, %p93
      %p95 = scmp.ne.s32.totalorder %s83, %s84
      %p96 = scmp.eq.s32.totalorder %s18, 1
      %p97 = por %p95, %p96
      %p99 = scmp.ne.s32.totalorder %s84, %s98
      %p100 = scmp.eq.s32.totalorder %s18, 0
      %p101 = por %p99, %p100
      %s102 = ssub.s32 %s19, %s31
      %s103 = ssub.s32 %s20, %s27
      %s104 = sor.u32 %s102, %s103
      %p105 = scmp.eq.s32.totalorder %s104, 0
      %s107 = sadd.s32 %s106, 1
      %s108 = scalar_select %p105, %s106, %s107
      %p111 = pneg %p105
      %p112 = scmp.eq.s32.totalorder %s12, 1
      %p113 = por %p111, %p112
      %p114 = scmp.ne.s32.totalorder %s106, %s109
      %p115 = scmp.eq.s32.totalorder %s12, 0
      %p116 = por %p114, %p115
      %p117 = scmp.ne.s32.totalorder %s106, %s109
      %p118 = scmp.eq.s32.totalorder %s17, 1
      %p119 = por %p117, %p118
      %p120 = scmp.ne.s32.totalorder %s109, %s110
      %p121 = scmp.eq.s32.totalorder %s17, 0
      %p122 = por %p120, %p121
      %p123 = scmp.ne.s32.totalorder %s109, %s110
      %p124 = scmp.eq.s32.totalorder %s18, 1
      %p125 = por %p123, %p124
      %p127 = scmp.ne.s32.totalorder %s110, %s126
      %p128 = scmp.eq.s32.totalorder %s18, 0
      %p129 = por %p127, %p128
      %p130 = scmp.le.s32.totalorder 1, %s12
      %p131 = scmp.lt.s32.totalorder %s12, 3
      %p132 = pnand %p130, %p131
      %p133 = pneg %p132
      // Predicated region
      $region9: #{tpu_custom_call.1} parent=5 // pred_check
        _
      $region10: #{tpu_custom_call.1} parent=5 // pred_check_branch
        %135 = sbr.rel (%p132) target = $region12
      $region11: #{tpu_custom_call.1} parent=5 // pred_region
        %s136 = ssub.s32 %s12, 1
        // Predicated region
        $region13: #{tpu_custom_call.1} parent=11 // pred_check
          %p137 = pneg %p73
        $region14: #{tpu_custom_call.1} parent=11 // pred_check_branch
          %139 = sbr.rel (%p137) target = $region16
        $region15: #{tpu_custom_call.1} parent=11 // pred_region
          _
        $region16: #{tpu_custom_call.1} parent=11 // pred_fallthru
          _
        // Predicated region
        $region17: #{tpu_custom_call.1} parent=11 // pred_check
          %p140 = pneg %p94
        $region18: #{tpu_custom_call.1} parent=11 // pred_check_branch
          %142 = sbr.rel (%p140) target = $region20
        $region19: #{tpu_custom_call.1} parent=11 // pred_region
          _
        $region20: #{tpu_custom_call.1} parent=11 // pred_fallthru
          _
      $region12: #{tpu_custom_call.1} parent=5 // pred_fallthru
        _
      %p143 = scmp.lt.s32.totalorder %s12, 2
      // Predicated region
      $region21: #{tpu_custom_call.1} parent=5 // pred_check
        %p144 = pneg %p143
      $region22: #{tpu_custom_call.1} parent=5 // pred_check_branch
        %146 = sbr.rel (%p144) target = $region24
      $region23: #{tpu_custom_call.1} parent=5 // pred_region
        // Predicated region
        $region25: #{tpu_custom_call.1} parent=23 // pred_check
          %p147 = pneg %p46
        $region26: #{tpu_custom_call.1} parent=23 // pred_check_branch
          %149 = sbr.rel (%p147) target = $region28
        $region27: #{tpu_custom_call.1} parent=23 // pred_region
          %p150 = scmp.lt.s32.totalorder %s19, 1
          %s151 = scalar_select %p150, %s19, 1
          %p152 = scmp.lt.s32.totalorder %s20, 0
          %s153 = scalar_select %p152, %s20, 0
          %s154 = smul.addr %s151, 4
          %s155 = sadd.s32 %s153, %s154
          %s156 = smul.addr %s155, 8
          %s157 = scalar_lea.vmem %s0, %s156
        $region28: #{tpu_custom_call.1} parent=23 // pred_fallthru
          _
      $region24: #{tpu_custom_call.1} parent=5 // pred_fallthru
        _
      %p158 = scmp.le.s32.totalorder 1, %s12
      %p159 = scmp.lt.s32.totalorder %s12, 3
      %p160 = pnand %p158, %p159
      %p161 = pneg %p160
      // Predicated region
      $region29: #{tpu_custom_call.1} parent=5 // pred_check
        _
      $region30: #{tpu_custom_call.1} parent=5 // pred_check_branch
        %163 = sbr.rel (%p160) target = $region32
      $region31: #{tpu_custom_call.1} parent=5 // pred_region
        %s164 = ssub.s32 %s12, 1
        %p165 = scmp.lt.s32.totalorder %s21, 1
        %s166 = scalar_select %p165, %s21, 1
        %p167 = scmp.lt.s32.totalorder %s22, 0
        %s168 = scalar_select %p167, %s22, 0
        %s169 = smul.addr %s166, 4
        %s170 = sadd.s32 %s168, %s169
        %s171 = smul.addr %s170, 8
        %s172 = scalar_lea.vmem %s0, %s171
        %p173 = pneg %p52
        %p174 = pneg %p49
        %p175 = pneg %p73
        %p176 = pneg %p70
        %p177 = pneg %p94
        %p178 = pneg %p91
        %p179 = pneg %p122
        %p180 = pneg %p119
        %s181 = sand.u32 %s109, 1
        %s182 = scalar_lea.sflag [#allocation3], %s181
        %s183 = sand.u32 %s109, 1
        %s184 = scalar_lea.vmem [#allocation2], %s183
        %p185 = scmp.lt.s32.totalorder %s21, 1
        %s186 = scalar_select %p185, %s21, 1
        %p187 = scmp.lt.s32.totalorder %s22, 0
        %s188 = scalar_select %p187, %s22, 0
        %s189 = smul.addr %s186, 4
        %s190 = sadd.s32 %s188, %s189
        %s191 = smul.addr %s190, 8
        %s192 = scalar_lea.vmem %s0, %s191
        %v194 = vld [vmem:[%s192] sm:$0xff]
        %v195 = vld [vmem:[%s192 + $0x8] sm:$0xff]
        %v196 = vld [vmem:[%s192 + $0x10] sm:$0xff]
        %v197 = vld [vmem:[%s192 + $0x18] sm:$0xff]
        %v198 = vpack.c.bf16 %v195, %v194
        %v199 = vpack.c.bf16 %v197, %v196
        %v200 = vld [vmem:[%s1] sm:$0xf]
        %v201 = vld [vmem:[%s1 + $0x4] sm:$0xf]
        %v202 = vld [vmem:[%s1 + $0x8] sm:$0xf]
        %v203 = vld [vmem:[%s1 + $0xc] sm:$0xf]
        %v208 = vunpack.c.l.b16 %v200
        %v209 = vunpack.c.l.b16 %v201
        %v210 = vunpack.c.l.b16 %v202
        %v211 = vunpack.c.l.b16 %v203
        %v212 = vpack.c.b16 %v209, %v208
        %v213 = vpack.c.b16 %v211, %v210
        %vm214 = vcmask 261120
        %v216 = vsel %vm214, %v212, 0
        %v219 = vsel %vm214, %v213, 0
        %221 = vmatpush.bf16.msra.mxu0 0
        %222 = vmatpush.bf16.msra.mxu0 0
        %223 = vmatpush.bf16.msra.mxu0 0
        %224 = vmatpush.bf16.msra.mxu0 0
        %225 = vmatpush.bf16.msra.mxu0 0
        %226 = vmatpush.bf16.msra.mxu0 0
        %227 = vmatpush.bf16.msra.mxu0 %v199
        %228 = vmatpush.bf16.msra.mxu0 %v198
        %229 = vmatmul.bf16.gmra.mxu0 %v216
        %v230 = vpop.f32.mrf.mxu0
        %v231 = vadd.f32 0.0, %v230
        %v232 = vpop.f32.mrf.mxu0
        %v233 = vadd.f32 0.0, %v232
        %234 = vmatmul.bf16.gmra.mxu0 %v219
        %v235 = vpop.f32.mrf.mxu0
        %v236 = vadd.f32 0.0, %v235
        %v237 = vpop.f32.mrf.mxu0
        %v238 = vadd.f32 0.0, %v237
        %239 = vdwg.mxu0
        %v240 = vtanh.pop %v231
        %v241 = vtanh.pop %v233
        %v242 = vxor.u32 %v236, 2147483648
        %v243 = vxor.u32 %v238, 2147483648
        %v244 = vmul.f32 %v242, 1.442695
        %v245 = vpow.pop %v244
        %v246 = vmul.f32 %v243, 1.442695
        %v247 = vpow.pop %v246
        %v248 = vadd.f32 %v245, 1.0
        %v249 = vadd.f32 %v247, 1.0
        %v250 = vrcp.pop %v248
        %v251 = vmul.f32 %v248, %v250
        %v252 = vsub.f32 1.0, %v251
        %v253 = vmul.f32 %v250, %v252
        %v254 = vadd.f32 %v250, %v253
        %vm255 = vweird.f32 %v248
        %vm256 = vweird.f32 %v250
        %vm257 = vmor %vm255, %vm256
        %v258 = vsel %vm257, %v250, %v254
        %v259 = vand.u32 2147483647, %v248
        %vm260 = vcmp.eq.f32.partialorder %v259, 8.507059e+37
        %v261 = vand.u32 %v248, 2147483648
        %v262 = vor.u32 1.1754944e-38, %v261
        %v263 = vsel %vm260, %v262, %v258
        %v264 = vmul.f32 1.0, %v263
        %v265 = vrcp.pop %v249
        %v266 = vmul.f32 %v249, %v265
        %v267 = vsub.f32 1.0, %v266
        %v268 = vmul.f32 %v265, %v267
        %v269 = vadd.f32 %v265, %v268
        %vm270 = vweird.f32 %v249
        %vm271 = vweird.f32 %v265
        %vm272 = vmor %vm270, %vm271
        %v273 = vsel %vm272, %v265, %v269
        %v274 = vand.u32 2147483647, %v249
        %vm275 = vcmp.eq.f32.partialorder %v274, 8.507059e+37
        %v276 = vand.u32 %v249, 2147483648
        %v277 = vor.u32 1.1754944e-38, %v276
        %v278 = vsel %vm275, %v277, %v273
        %v279 = vmul.f32 1.0, %v278
        %v280 = vmul.f32 %v240, %v264
        %v281 = vmul.f32 %v241, %v279
        %v282 = vld [vmem:[%s2] sm:$0xff]
        %v283 = vld [vmem:[%s2 + $0x8] sm:$0xff]
        %285 = vset.pattern.permute.xlu0 0
        %286 = vperm.xlu0 %285, %v282
        %v287 = vpop.permute.xlu0 %286
        %290 = vset.pattern.permute.xlu0 0
        %291 = vperm.xlu0 %290, %v283
        %v292 = vpop.permute.xlu0 %291
        %v294 = vmul.f32 %v287, %v280
        %v295 = vmul.f32 %v292, %v281
        %vm296 = vcmask 64512
        %v297 = vsel %vm296, %v294, 0.0
        %v298 = vsel %vm296, %v295, 0.0
        %v299 = vadd.f32 %v297, %v298
        %v300 = vrot.slane %v299, 4
        %v301 = vadd.f32 %v299, %v300
        %v302 = vrot.slane %v301, 2
        %v303 = vadd.f32 %v301, %v302
        %v304 = vrot.slane %v303, 1
        %v305 = vadd.f32 %v303, %v304
        %vm306 = vcmask 57344
        %307 = vst.msk [vmem:[%s184] sm:$0x1] %vm306, %v305
        %s308 = sand.u32 %s109, 1
        %s309 = scalar_lea.sflag [#allocation3], %s308
        %s310 = sand.u32 %s109, 1
        %s311 = scalar_lea.vmem [#allocation2], %s310
        // Predicated region
        $region33: #{tpu_custom_call.1} parent=31 // pred_check
          %p312 = pneg %p119
        $region34: #{tpu_custom_call.1} parent=31 // pred_check_branch
          %314 = sbr.rel (%p312) target = $region36
        $region35: #{tpu_custom_call.1} parent=31 // pred_region
          %316 = vsyncadd %s309, 0
          %s317 = sadd.s32 %s22, %s21
          %s318 = scalar_lea.hbm %s3, %s317
          %s320 = sshll.u32 %s311, 4
          %s321 = int_to_ptr.vmem [resolvable:$true] %s320
          %s322 = sshll.u32 %s318, 4
          %s323 = int_to_ptr.hbm [resolvable:$true] %s322
          %325 = dma.vmem_to_hbm [thread:$0]  %s321, 16, %s323, %s309
        $region36: #{tpu_custom_call.1} parent=31 // pred_fallthru
          _
      $region32: #{tpu_custom_call.1} parent=5 // pred_fallthru
        _
      %p326 = scmp.le.s32.totalorder 2, %s12
      // Predicated region
      $region37: #{tpu_custom_call.1} parent=5 // pred_check
        %p327 = pneg %p326
      $region38: #{tpu_custom_call.1} parent=5 // pred_check_branch
        %329 = sbr.rel (%p327) target = $region40
      $region39: #{tpu_custom_call.1} parent=5 // pred_region
        %s330 = ssub.s32 %s12, 2
        // Predicated region
        $region41: #{tpu_custom_call.1} parent=39 // pred_check
          %p331 = pneg %p125
        $region42: #{tpu_custom_call.1} parent=39 // pred_check_branch
          %333 = sbr.rel (%p331) target = $region44
        $region43: #{tpu_custom_call.1} parent=39 // pred_region
          %s334 = sand.u32 %s110, 1
          %s335 = scalar_lea.sflag [#allocation3], %s334
          %s336 = sand.u32 %s110, 1
          %s337 = scalar_lea.vmem [#allocation2], %s336
          %339 = dma.done %s335, 16
        $region44: #{tpu_custom_call.1} parent=39 // pred_fallthru
          _
      $region40: #{tpu_custom_call.1} parent=5 // pred_fallthru
        _
    $region6: #{tpu_custom_call.1} parent=1 // loop_footer
      %s16 = sadd.s32 1, %s12
    $region7: #{tpu_custom_call.1} parent=1 // loop_footer_branch
      %11 = sbr.rel target = $region3
    $region8: #{tpu_custom_call.1} parent=1 // loop_exit
      _
    %340 = vsyncpa [#allocation3], 1
    %s341 = scalar_lea.sflag [#allocation3], 1
    %342 = vsyncpa %s341, 1

</llo_original>
